<compile_context>
chip_gen: v7x
topology: tpu7x:2x2x1
jax: 0.10.0
libtpu: 0.0.40
codegen_flags: <defaults>
</compile_context>

<pallas_src>
import functools

import jax
import jax.numpy as jnp
from jax.experimental import pallas as pl
from jax.experimental.pallas import tpu as pltpu


# ---------------------------------------------------------------------------
# Kernels
# ---------------------------------------------------------------------------
def _pool_max(y, pool_size, tile_out):
    # y: (block_b, pool_size * tile_out); column c = p*tile_out + ol, i.e. each
    # pool slot is a lane-contiguous tile_out-wide slice (aligned when
    # tile_out % 128 == 0).  Pure VPU work.
    # TODO(synk): for OUT < 128 the slices/stores are lane-sparse; a lane-dense
    # repack (multiple batch rows per output row) needs a consumer relayout.
    acc = y[:, :tile_out]
    for p in range(1, pool_size):              # POOL is small & static -> unrolled
        acc = jnp.maximum(acc, y[:, p * tile_out:(p + 1) * tile_out])
    return acc


def _maxout_kernel(x_ref, w_ref, b_ref, o_ref, *, pool_size, tile_out):
    # Single-K-block path (no accumulator needed).
    w = w_ref[...]
    x = x_ref[...].astype(w.dtype)             # no-op if x already in compute dtype
    y = jnp.dot(x, w, preferred_element_type=jnp.float32) + b_ref[...]
    o_ref[...] = _pool_max(y, pool_size, tile_out).astype(o_ref.dtype)


def _maxout_kernel_ktiled(x_ref, w_ref, b_ref, o_ref, acc_ref, *,
                          pool_size, tile_out):
    # K-tiled path: f32 accumulator lives in VMEM scratch across the K axis.
    k = pl.program_id(2)

    @pl.when(k == 0)
    def _():
        acc_ref[...] = jnp.zeros_like(acc_ref)

    w = w_ref[...]
    x = x_ref[...].astype(w.dtype)
    acc_ref[...] += jnp.dot(x, w, preferred_element_type=jnp.float32)

    @pl.when(k == pl.num_programs(2) - 1)
    def _():
        y = acc_ref[...] + b_ref[...]
        o_ref[...] = _pool_max(y, pool_size, tile_out).astype(o_ref.dtype)


# ---------------------------------------------------------------------------
# Hardware / tiling heuristics
# ---------------------------------------------------------------------------
def _vmem_capacity_bytes():
    """Per-core VMEM capacity; conservative 64 MiB fallback (v7x-sized)."""
    default = 64 << 20
    try:
        info_fn = getattr(pltpu, "get_tpu_info", None)
        if info_fn is None:
            return default
        cap = int(info_fn().vmem_capacity_bytes)
        return cap if cap > 0 else default
    except Exception:
        return default


def _choose_tile_out(out_feature, vmem_cap):
    """OUT tile width: full OUT for small / non-128-multiple OUT; otherwise
    128/256, or 512 on 128 MiB VMEM parts (v6e/v5e) where the wider W block fits."""
    if out_feature % 128 != 0 or out_feature <= 256:
        return out_feature
    if vmem_cap >= (100 << 20) and out_feature % 512 == 0:
        return 512
    return 256 if out_feature % 256 == 0 else 128


def _choose_tile_k(in_feature, cols, w_bytes, budget):
    """K (IN) tile: full IN when the weight block is cheap; otherwise the largest
    128-multiple divisor of IN keeping the double-buffered W block to ~budget/4."""
    target = max(budget // 4, 2 << 20)
    if 2 * in_feature * cols * w_bytes <= target:
        return in_feature
    if in_feature % 128 != 0:
        return in_feature   # cannot K-tile cleanly; block_b will shrink instead
    for tk in (16384, 8192, 4096, 2048, 1024, 512, 256, 128):
        if tk <= in_feature and in_feature % tk == 0 and 2 * tk * cols * w_bytes <= target:
            return tk
    return 128


def _vmem_bytes(block_b, tk, cols, tn, x_bytes, w_bytes, cast_x, ktiled):
    """Resident VMEM: double-buffered streamed blocks + in-kernel temporaries."""
    db = 2 * (block_b * tk * x_bytes          # x block
              + tk * cols * w_bytes           # weight block
              + cols * 4                      # bias block
              + block_b * tn * 4)             # output block
    tmp = block_b * cols * 4                  # f32 matmul result y
    if cast_x:
        tmp += block_b * tk * w_bytes         # in-kernel astype copy of x
    if ktiled:
        tmp += block_b * cols * 4             # f32 accumulator scratch
    return db + tmp


def _choose_block_b(B, tk, cols, tn, x_bytes, w_bytes, cast_x, ktiled,
                    budget, prefer_split):
    """Largest multiple-of-8 batch block that fits the (accurate) VMEM budget.
    Prefers divisors of the padded batch (minimizes padding); on v7x only,
    prefers >= 2 batch blocks when there is no other parallel grid axis."""
    b8 = ((max(B, 1) + 7) // 8) * 8

    def fits(c):
        return _vmem_bytes(c, tk, cols, tn, x_bytes, w_bytes, cast_x, ktiled) <= budget

    cands = [c for c in (4096, 2048, 1024, 512, 256, 128, 64, 32, 16, 8) if c <= b8]
    if not cands:
        cands = [8]
    fitting = [c for c in cands if fits(c)]
    if not fitting:
        fitting = [min(cands)]   # forced minimum; vmem_limit is raised to match
    divs = [c for c in fitting if b8 % c == 0]
    pool = divs if divs else fitting
    best = pool[0]
    if prefer_split and best >= b8:
        for c in pool[1:]:
            if c < b8:
                best = c
                break
    return best


# ---------------------------------------------------------------------------
# Parameter preparation (hoisted out of the per-call path)
# ---------------------------------------------------------------------------
def prepare_maxout_params(weight, bias, out_feature, pool_size,
                          compute_dtype=jnp.bfloat16, tile_out=None):
    """Rearrange nn.Linear params once.

    weight: (out_feature*pool_size, in_feature)  -- PyTorch layout, row r = o*POOL + p
    bias:   (out_feature*pool_size,)
    Returns (w2, b2):
      w2: (in_feature, n_tiles*pool_size*tile_out) in compute_dtype, column
          c = j*(POOL*tn) + p*tn + ol  <->  output feature o = j*tn + ol, pool p.
      b2: (1, n_tiles*pool_size*tile_out) float32, same column order.
    """
    op, in_feature = weight.shape
    assert op == out_feature * pool_size
    assert bias.shape == (out_feature * pool_size,)

    tn = tile_out if tile_out is not None else _choose_tile_out(
        out_feature, _vmem_capacity_bytes())
    assert out_feature % tn == 0
    n_tiles = out_feature // tn

    w4 = weight.reshape(n_tiles, tn, pool_size, in_feature)
    w2 = jnp.transpose(w4, (3, 0, 2, 1)).reshape(
        in_feature, n_tiles * pool_size * tn)

    b4 = bias.reshape(n_tiles, tn, pool_size)
    b2 = jnp.transpose(b4, (0, 2, 1)).reshape(1, n_tiles * pool_size * tn)

    return w2.astype(compute_dtype), b2.astype(jnp.float32)


# ---------------------------------------------------------------------------
# Forward
# ---------------------------------------------------------------------------
def maxout_forward(x, w2, b2, *, out_feature, pool_size,
                   block_b=None, tile_out=None, tile_k=None):
    """x: (..., in_feature). Returns (prod(leading dims), out_feature) float32."""
    in_feature = x.shape[-1]
    x2 = x.reshape(-1, in_feature)          # PyTorch view(-1, ...) semantics
    B = x2.shape[0]

    vmem_cap = _vmem_capacity_bytes()
    budget = int(vmem_cap * 0.65)           # ~42 MiB on v7x, ~83 MiB on v5e/v6e

    tn = tile_out if tile_out is not None else _choose_tile_out(out_feature, vmem_cap)
    assert out_feature % tn == 0
    n_tiles = out_feature // tn
    cols = pool_size * tn
    assert w2.shape == (in_feature, n_tiles * cols), (w2.shape, in_feature, n_tiles, cols)
    assert b2.shape == (1, n_tiles * cols)

    x_bytes = jnp.dtype(x2.dtype).itemsize
    w_bytes = jnp.dtype(w2.dtype).itemsize
    cast_x = x2.dtype != w2.dtype           # if the producer emits compute-dtype x,
                                            # the in-kernel cast (and its VMEM) vanishes

    tk = tile_k if tile_k is not None else _choose_tile_k(in_feature, cols, w_bytes, budget)
    assert in_feature % tk == 0
    nk = in_feature // tk
    ktiled = nk > 1

    if block_b is None:
        prefer_split = (vmem_cap <= (80 << 20)) and n_tiles == 1   # v7x: 2 TensorCores
        block_b = _choose_block_b(B, tk, cols, tn, x_bytes, w_bytes,
                                  cast_x, ktiled, budget, prefer_split)

    # Pad the batch to a multiple of block_b (pad rows are discarded below).
    B_pad = ((B + block_b - 1) // block_b) * block_b
    if B_pad != B:
        x2 = jnp.pad(x2, ((0, B_pad - B), (0, 0)))
    nb = B_pad // block_b

    needed = _vmem_bytes(block_b, tk, cols, tn, x_bytes, w_bytes, cast_x, ktiled)
    vmem_limit = int(min(max(needed * 2, 32 << 20), int(vmem_cap * 0.9)))

    if not ktiled:
        # Pick the outer grid axis so the larger re-fetch stream stays resident:
        #   batch outer: x block resident across OUT tiles, full W2 re-read per batch block
        #   OUT   outer: W tile resident across batch blocks, full x re-read per OUT tile
        w_refetch = in_feature * n_tiles * cols * w_bytes * (nb - 1)
        x_refetch = B_pad * in_feature * x_bytes * (n_tiles - 1)
        kernel = functools.partial(_maxout_kernel, pool_size=pool_size, tile_out=tn)
        if w_refetch > x_refetch:
            grid = (n_tiles, nb)
            in_specs = [
                pl.BlockSpec((block_b, in_feature), lambda j, i: (i, 0)),
                pl.BlockSpec((in_feature, cols), lambda j, i: (0, j)),
                pl.BlockSpec((1, cols), lambda j, i: (0, j)),
            ]
            out_spec = pl.BlockSpec((block_b, tn), lambda j, i: (i, j))
        else:
            grid = (nb, n_tiles)
            in_specs = [
                pl.BlockSpec((block_b, in_feature), lambda i, j: (i, 0)),
                pl.BlockSpec((in_feature, cols), lambda i, j: (0, j)),
                pl.BlockSpec((1, cols), lambda i, j: (0, j)),
            ]
            out_spec = pl.BlockSpec((block_b, tn), lambda i, j: (i, j))
        scratch = []
        semantics = ("parallel", "parallel")
    else:
        kernel = functools.partial(_maxout_kernel_ktiled, pool_size=pool_size, tile_out=tn)
        grid = (nb, n_tiles, nk)
        in_specs = [
            pl.BlockSpec((block_b, tk), lambda i, j, k: (i, k)),
            pl.BlockSpec((tk, cols), lambda i, j, k: (k, j)),
            pl.BlockSpec((1, cols), lambda i, j, k: (0, j)),
        ]
        out_spec = pl.BlockSpec((block_b, tn), lambda i, j, k: (i, j))
        scratch = [pltpu.VMEM((block_b, cols), jnp.float32)]
        semantics = ("parallel", "parallel", "arbitrary")

    out = pl.pallas_call(
        kernel,
        out_shape=jax.ShapeDtypeStruct((B_pad, out_feature), jnp.float32),
        grid_spec=pltpu.PrefetchScalarGridSpec(
            num_scalar_prefetch=0,
            grid=grid,
            in_specs=in_specs,
            out_specs=out_spec,
            scratch_shapes=scratch,
        ),
        compiler_params=pltpu.CompilerParams(
            dimension_semantics=semantics,
            vmem_limit_bytes=vmem_limit,
        ),
    )(x2, w2, b2)

    return out[:B] if B_pad != B else out


def maxout_pallas(x, weight, bias, out_feature, pool_size,
                  compute_dtype=jnp.bfloat16, block_b=None,
                  tile_out=None, tile_k=None):
    """Convenience wrapper: rearrange params and run the kernel.
    For repeated inference, call prepare_maxout_params once and reuse w2/b2."""
    w2, b2 = prepare_maxout_params(weight, bias, out_feature, pool_size,
                                   compute_dtype=compute_dtype, tile_out=tile_out)
    return maxout_forward(x, w2, b2, out_feature=out_feature, pool_size=pool_size,
                          block_b=block_b, tile_out=tile_out, tile_k=tile_k)


def maxout_reference(x, weight, bias, out_feature, pool_size):
    x2 = x.reshape(-1, x.shape[-1])
    y = x2 @ weight.T + bias                      # (B, OUT*POOL)
    y = y.reshape(-1, out_feature, pool_size)     # (B, OUT, POOL)
    return y.max(axis=2)                          # (B, OUT)


# ---------------------------------------------------------------------------
# Self-test
# ---------------------------------------------------------------------------
if __name__ == "__main__":
    def run_case(name, B, IN, OUT, POOL, compute_dtype, **overrides):
        key = jax.random.PRNGKey(0)
        kx, kw, kb = jax.random.split(key, 3)
        x = jax.random.normal(kx, (B, IN), dtype=jnp.float32)
        # Deterministic synthetic init for nn.Linear(in_feature, out_feature*pool_size)
        bound = 1.0 / (IN ** 0.5)
        weight = jax.random.uniform(kw, (OUT * POOL, IN), minval=-bound,
                                    maxval=bound, dtype=jnp.float32)
        bias = jax.random.uniform(kb, (OUT * POOL,), minval=-bound,
                                  maxval=bound, dtype=jnp.float32)

        ref = maxout_reference(x, weight, bias, OUT, POOL)
        out = jax.block_until_ready(
            maxout_pallas(x, weight, bias, OUT, POOL,
                          compute_dtype=compute_dtype, **overrides))
        assert out.shape == (B, OUT), (name, out.shape)
        tol = 1e-5 if compute_dtype == jnp.float32 else 5e-2
        assert jnp.allclose(out, ref, atol=tol, rtol=tol), f"{name}: mismatch vs reference"

    # Small baseline case, f32 (exact parity with the PyTorch module) and bf16 weights.
    run_case("small_f32", 16, 32, 16, 4, jnp.float32)
    run_case("small_bf16", 16, 32, 16, 4, jnp.bfloat16)
    # Batch not a multiple of 8 (exercises batch padding) and odd pool size.
    run_case("pad_batch", 10, 64, 8, 3, jnp.float32)
    # Force the K-tiled accumulator path and multi-tile OUT (small shapes, fast compile).
    run_case("ktiled", 8, 256, 256, 2, jnp.float32, tile_out=128, tile_k=128)

    print("KERNEL_OK")
</pallas_src>

<mosaic_0001>
module attributes {stable_mosaic.version = 11 : i64} {
  func.func @_maxout_kernel(%arg0: i32, %arg1: i32, %arg2: memref<8x32xf32, #tpu.memory_space<vmem>>, %arg3: memref<32x64xf32, #tpu.memory_space<vmem>>, %arg4: memref<1x64xf32, #tpu.memory_space<vmem>>, %arg5: memref<8x16xf32, #tpu.memory_space<vmem>>) attributes {dimension_semantics = [#tpu.dimension_semantics<parallel>, #tpu.dimension_semantics<parallel>], iteration_bounds = array<i64: 1, 2>, scalar_prefetch = 0 : i64, scratch_operands = 0 : i64, tpu.core_type = #tpu.core_type<tc>, window_params = [{transform_indices = @transform_0, window_bounds = array<i64: 8, 32>}, {transform_indices = @transform_1, window_bounds = array<i64: 32, 64>}, {transform_indices = @transform_2, window_bounds = array<i64: 1, 64>}, {transform_indices = @transform_3, window_bounds = array<i64: 8, 16>}]} {
    %c0 = arith.constant 0 : index
    %c0_0 = arith.constant 0 : index
    %0 = vector.load %arg3[%c0, %c0_0] : memref<32x64xf32, #tpu.memory_space<vmem>>, vector<32x64xf32>
    %c0_1 = arith.constant 0 : index
    %c0_2 = arith.constant 0 : index
    %1 = vector.load %arg2[%c0_1, %c0_2] : memref<8x32xf32, #tpu.memory_space<vmem>>, vector<8x32xf32>
    %cst = arith.constant dense<0.000000e+00> : vector<8x64xf32>
    %2 = tpu.matmul %1, %0, %cst {dimension_numbers = #tpu.dot_dimension_numbers<[1], [0], [0], [1], [0, 0, 1, 1], [], []>} : vector<8x32xf32>, vector<32x64xf32>, vector<8x64xf32> -> vector<8x64xf32>
    %c0_3 = arith.constant 0 : index
    %c0_4 = arith.constant 0 : index
    %3 = vector.load %arg4[%c0_3, %c0_4] : memref<1x64xf32, #tpu.memory_space<vmem>>, vector<1x64xf32>
    %4 = vector.broadcast %3 : vector<1x64xf32> to vector<8x64xf32>
    %5 = arith.addf %2, %4 : vector<8x64xf32>
    %6 = vector.extract_strided_slice %5 {offsets = [0, 0], sizes = [8, 16], strides = [1, 1]} : vector<8x64xf32> to vector<8x16xf32>
    %7 = vector.extract_strided_slice %5 {offsets = [0, 16], sizes = [8, 16], strides = [1, 1]} : vector<8x64xf32> to vector<8x16xf32>
    %8 = arith.maximumf %6, %7 : vector<8x16xf32>
    %9 = vector.extract_strided_slice %5 {offsets = [0, 32], sizes = [8, 16], strides = [1, 1]} : vector<8x64xf32> to vector<8x16xf32>
    %10 = arith.maximumf %8, %9 : vector<8x16xf32>
    %11 = vector.extract_strided_slice %5 {offsets = [0, 48], sizes = [8, 16], strides = [1, 1]} : vector<8x64xf32> to vector<8x16xf32>
    %12 = arith.maximumf %10, %11 : vector<8x16xf32>
    %c0_5 = arith.constant 0 : index
    %c0_6 = arith.constant 0 : index
    %13 = vector.load %arg5[%c0_5, %c0_6] : memref<8x16xf32, #tpu.memory_space<vmem>>, vector<8x16xf32>
    tpu.vector_store %arg5[%c0_5, %c0_6], %12 {strides = array<i32>} : memref<8x16xf32, #tpu.memory_space<vmem>>, vector<8x16xf32>,
    return
  }
  func.func @transform_0(%arg0: i32, %arg1: i32) -> (i32, i32) {
    %c0_i32 = arith.constant 0 : i32
    %c0_i32_0 = arith.constant 0 : i32
    return %arg1, %c0_i32 : i32, i32
  }
  func.func @transform_1(%arg0: i32, %arg1: i32) -> (i32, i32) {
    %c0_i32 = arith.constant 0 : i32
    %c0_i32_0 = arith.constant 0 : i32
    return %c0_i32, %arg0 : i32, i32
  }
  func.func @transform_2(%arg0: i32, %arg1: i32) -> (i32, i32) {
    %c0_i32 = arith.constant 0 : i32
    %c0_i32_0 = arith.constant 0 : i32
    return %c0_i32, %arg0 : i32, i32
  }
  func.func @transform_3(%arg0: i32, %arg1: i32) -> (i32, i32) {
    %c0_i32 = arith.constant 0 : i32
    return %arg1, %arg0 : i32, i32
  }
}

</mosaic_0001>

<llo_original>
// kernel: tpu_custom_call.1
$region0: #{tpu_custom_call.1}
  #allocation0 [shape = 'u32[]', space=smem, size = 0x4, offset = 0x4, fixed_abs, tag = 'smem constant byte address 0x4 - core index']
  #allocation1 [shape = 'u32[144,128]{1,0:T(1,128)}', space=vmem, size = 0x12000, scoped, tag = 'internal scratch']
  %s0 = inlined_call_operand.hbm [shape: f32[16,32], index: 0, kind: input, shape index: {}]
  %s1 = inlined_call_operand.hbm [shape: f32[32,64], index: 1, kind: input, shape index: {}]
  %s2 = inlined_call_operand.vmem [shape: f32[1,64], index: 2, kind: input, shape index: {}]
  %s3 = inlined_call_operand.hbm [shape: f32[16,16], index: 3, kind: output, shape index: {}]
  %s4 = sld [smem:[#allocation0]]
  $region53: #{tpu_custom_call.1} parent=0
    _
  %s6 = ssub.s32 1, %s4
  %s7 = scalar_select 0, %s6, %s4
  $region1: #{tpu_custom_call.1} parent=0
    #allocation2 [shape = 'u8[8192]{0}', space=vmem, size = 0x2000, scoped, tag = 'input window, operand 0']
    #allocation3 [shape = 's32[2]{0}', space=sflag, size = 0x8, scoped, tag = 'scoped memory for tpu_custom_call.1']
    #allocation4 [shape = 's32[2]{0}', space=sflag, size = 0x8, scoped, tag = 'scoped memory for tpu_custom_call.1']
    #allocation5 [shape = 'u8[16384]{0}', space=vmem, size = 0x4000, scoped, tag = 'input window, operand 1, single buffered']
    #allocation6 [shape = 's32[1]{0}', space=sflag, size = 0x4, scoped, tag = 'scoped memory for tpu_custom_call.1']
    #allocation7 [shape = 'u8[8192]{0}', space=vmem, size = 0x2000, scoped, tag = 'output window, operand 0']
    %8 = vsyncpa [#allocation3], 0
    %s9 = scalar_lea.sflag [#allocation3], 1
    %10 = vsyncpa %s9, 0
    %11 = vsyncpa [#allocation6], 0
    %12 = vsyncpa [#allocation4], 0
    %s13 = scalar_lea.sflag [#allocation4], 1
    %14 = vsyncpa %s13, 0
    loop: start=0, step=1, limit=4
    $region2: #{tpu_custom_call.1} parent=1 // loop_pre_header
      _
    $region3: #{tpu_custom_call.1} parent=1 // loop_header
      %s16 = sphi 0, %s20
      %p17 = scmp.ge.s32.totalorder %s16, 4
      %s23 = sphi 0, %s35
      %s24 = sphi 0, %s31
      %s25 = sphi 0, %s23
      %s26 = sphi 0, %s24
      %s27 = sphi 0, %s25
      %s28 = sphi 0, %s26
      %s38 = sphi 0, %s40
      %s41 = sphi 0, %s38
      %s42 = sphi 0, %s41
      %s58 = sphi 0, %s42
      %s64 = sphi 0, %s66
      %s67 = sphi 0, %s64
      %s68 = sphi 0, %s67
      %s84 = sphi 0, %s68
      %s90 = sphi 0, %s92
      %s93 = sphi 0, %s90
      %s94 = sphi 0, %s93
      %s110 = sphi 0, %s94
      %s118 = sphi 0, %s120
      %s121 = sphi 0, %s118
      %s122 = sphi 0, %s121
      %s138 = sphi 0, %s122
    $region4: #{tpu_custom_call.1} parent=1 // loop_header_branch
      %19 = sbr.rel (%p17) target = $region8
    $region5: #{tpu_custom_call.1} parent=1 // loop_body
      %s21 = ssub.s32 %s16, 1
      %s22 = ssub.s32 %s16, 2
      %s29 = sadd.s32 1, %s24
      %p30 = scmp.ge.s32.totalorder %s29, 2
      %s31 = scalar_select %p30, 0, %s29
      %s32 = sadd.s32 1, %s23
      %s33 = scalar_select %p30, %s32, %s23
      %p34 = scmp.ge.s32.totalorder %s33, 1
      %s35 = scalar_select %p34, 0, %s33
      %s36 = ssub.s32 %s24, %s31
      %p37 = scmp.eq.s32.totalorder %s36, 0
      %s39 = sadd.s32 %s38, 1
      %s40 = scalar_select %p37, %s38, %s39
      %p43 = pneg %p37
      %p44 = scmp.eq.s32.totalorder %s16, 1
      %p45 = por %p43, %p44
      %p46 = scmp.ne.s32.totalorder %s38, %s41
      %p47 = scmp.eq.s32.totalorder %s16, 0
      %p48 = por %p46, %p47
      %p49 = scmp.ne.s32.totalorder %s38, %s41
      %p50 = scmp.eq.s32.totalorder %s21, 1
      %p51 = por %p49, %p50
      %p52 = scmp.ne.s32.totalorder %s41, %s42
      %p53 = scmp.eq.s32.totalorder %s21, 0
      %p54 = por %p52, %p53
      %p55 = scmp.ne.s32.totalorder %s41, %s42
      %p56 = scmp.eq.s32.totalorder %s22, 1
      %p57 = por %p55, %p56
      %p59 = scmp.ne.s32.totalorder %s42, %s58
      %p60 = scmp.eq.s32.totalorder %s22, 0
      %p61 = por %p59, %p60
      %s62 = ssub.s32 %s23, %s35
      %p63 = scmp.eq.s32.totalorder %s62, 0
      %s65 = sadd.s32 %s64, 1
      %s66 = scalar_select %p63, %s64, %s65
      %p69 = pneg %p63
      %p70 = scmp.eq.s32.totalorder %s16, 1
      %p71 = por %p69, %p70
      %p72 = scmp.ne.s32.totalorder %s64, %s67
      %p73 = scmp.eq.s32.totalorder %s16, 0
      %p74 = por %p72, %p73
      %p75 = scmp.ne.s32.totalorder %s64, %s67
      %p76 = scmp.eq.s32.totalorder %s21, 1
      %p77 = por %p75, %p76
      %p78 = scmp.ne.s32.totalorder %s67, %s68
      %p79 = scmp.eq.s32.totalorder %s21, 0
      %p80 = por %p78, %p79
      %p81 = scmp.ne.s32.totalorder %s67, %s68
      %p82 = scmp.eq.s32.totalorder %s22, 1
      %p83 = por %p81, %p82
      %p85 = scmp.ne.s32.totalorder %s68, %s84
      %p86 = scmp.eq.s32.totalorder %s22, 0
      %p87 = por %p85, %p86
      %s88 = ssub.s32 %s23, %s35
      %p89 = scmp.eq.s32.totalorder %s88, 0
      %s91 = sadd.s32 %s90, 1
      %s92 = scalar_select %p89, %s90, %s91
      %p95 = pneg %p89
      %p96 = scmp.eq.s32.totalorder %s16, 1
      %p97 = por %p95, %p96
      %p98 = scmp.ne.s32.totalorder %s90, %s93
      %p99 = scmp.eq.s32.totalorder %s16, 0
      %p100 = por %p98, %p99
      %p101 = scmp.ne.s32.totalorder %s90, %s93
      %p102 = scmp.eq.s32.totalorder %s21, 1
      %p103 = por %p101, %p102
      %p104 = scmp.ne.s32.totalorder %s93, %s94
      %p105 = scmp.eq.s32.totalorder %s21, 0
      %p106 = por %p104, %p105
      %p107 = scmp.ne.s32.totalorder %s93, %s94
      %p108 = scmp.eq.s32.totalorder %s22, 1
      %p109 = por %p107, %p108
      %p111 = scmp.ne.s32.totalorder %s94, %s110
      %p112 = scmp.eq.s32.totalorder %s22, 0
      %p113 = por %p111, %p112
      %s114 = ssub.s32 %s24, %s31
      %s115 = ssub.s32 %s23, %s35
      %s116 = sor.u32 %s114, %s115
      %p117 = scmp.eq.s32.totalorder %s116, 0
      %s119 = sadd.s32 %s118, 1
      %s120 = scalar_select %p117, %s118, %s119
      %p123 = pneg %p117
      %p124 = scmp.eq.s32.totalorder %s16, 1
      %p125 = por %p123, %p124
      %p126 = scmp.ne.s32.totalorder %s118, %s121
      %p127 = scmp.eq.s32.totalorder %s16, 0
      %p128 = por %p126, %p127
      %p129 = scmp.ne.s32.totalorder %s118, %s121
      %p130 = scmp.eq.s32.totalorder %s21, 1
      %p131 = por %p129, %p130
      %p132 = scmp.ne.s32.totalorder %s121, %s122
      %p133 = scmp.eq.s32.totalorder %s21, 0
      %p134 = por %p132, %p133
      %p135 = scmp.ne.s32.totalorder %s121, %s122
      %p136 = scmp.eq.s32.totalorder %s22, 1
      %p137 = por %p135, %p136
      %p139 = scmp.ne.s32.totalorder %s122, %s138
      %p140 = scmp.eq.s32.totalorder %s22, 0
      %p141 = por %p139, %p140
      %p142 = scmp.le.s32.totalorder 1, %s16
      %p143 = scmp.lt.s32.totalorder %s16, 3
      %p144 = pnand %p142, %p143
      %p145 = pneg %p144
      // Predicated region
      $region9: #{tpu_custom_call.1} parent=5 // pred_check
        _
      $region10: #{tpu_custom_call.1} parent=5 // pred_check_branch
        %147 = sbr.rel (%p144) target = $region12
      $region11: #{tpu_custom_call.1} parent=5 // pred_region
        %s148 = ssub.s32 %s16, 1
        // Predicated region
        $region13: #{tpu_custom_call.1} parent=11 // pred_check
          %p149 = pneg %p80
        $region14: #{tpu_custom_call.1} parent=11 // pred_check_branch
          %151 = sbr.rel (%p149) target = $region16
        $region15: #{tpu_custom_call.1} parent=11 // pred_region
          %s153 = ssub.s32 512, 512
          %154 = vsyncadd [#allocation6], %s153
          %s155 = smul.addr %s25, 128
          %s156 = scalar_lea.hbm %s1, %s155
          %s157 = sshll.u32 [#allocation5], 4
          %s158 = int_to_ptr.vmem [resolvable:$true] %s157
          %163 = dma.hbm_to_vmem [thread:$0]  %s156, 512, %s158, [#allocation6], 128, 128, 8
        $region16: #{tpu_custom_call.1} parent=11 // pred_fallthru
          _
        // Predicated region
        $region17: #{tpu_custom_call.1} parent=11 // pred_check
          %p164 = pneg %p106
        $region18: #{tpu_custom_call.1} parent=11 // pred_check_branch
          %166 = sbr.rel (%p164) target = $region20
        $region19: #{tpu_custom_call.1} parent=11 // pred_region
          %p167 = scmp.lt.s32.totalorder %s25, 0
          %s168 = scalar_select %p167, %s25, 0
          %s169 = scalar_lea.vmem %s2, %s168
        $region20: #{tpu_custom_call.1} parent=11 // pred_fallthru
          _
      $region12: #{tpu_custom_call.1} parent=5 // pred_fallthru
        _
      %p170 = scmp.lt.s32.totalorder %s16, 2
      // Predicated region
      $region21: #{tpu_custom_call.1} parent=5 // pred_check
        %p171 = pneg %p170
      $region22: #{tpu_custom_call.1} parent=5 // pred_check_branch
        %173 = sbr.rel (%p171) target = $region24
      $region23: #{tpu_custom_call.1} parent=5 // pred_region
        // Predicated region
        $region25: #{tpu_custom_call.1} parent=23 // pred_check
          %p174 = pneg %p48
        $region26: #{tpu_custom_call.1} parent=23 // pred_check_branch
          %176 = sbr.rel (%p174) target = $region28
        $region27: #{tpu_custom_call.1} parent=23 // pred_region
          %s177 = sand.u32 %s38, 1
          %s178 = scalar_lea.sflag [#allocation3], %s177
          %s179 = sand.u32 %s38, 1
          %s180 = smul.addr %s179, 8
          %s181 = scalar_lea.vmem [#allocation2], %s180
          %s183 = ssub.s32 128, 128
          %184 = vsyncadd %s178, %s183
          %s185 = smul.addr %s24, 128
          %s186 = scalar_lea.hbm %s0, %s185
          %s188 = sshll.u32 %s181, 4
          %s189 = int_to_ptr.vmem [resolvable:$true] %s188
          %191 = dma.hbm_to_vmem [thread:$0]  %s186, 128, %s189, %s178
        $region28: #{tpu_custom_call.1} parent=23 // pred_fallthru
          _
      $region24: #{tpu_custom_call.1} parent=5 // pred_fallthru
        _
      %p192 = scmp.le.s32.totalorder 1, %s16
      %p193 = scmp.lt.s32.totalorder %s16, 3
      %p194 = pnand %p192, %p193
      %p195 = pneg %p194
      // Predicated region
      $region29: #{tpu_custom_call.1} parent=5 // pred_check
        _
      $region30: #{tpu_custom_call.1} parent=5 // pred_check_branch
        %197 = sbr.rel (%p194) target = $region32
      $region31: #{tpu_custom_call.1} parent=5 // pred_region
        %s198 = ssub.s32 %s16, 1
        %s199 = sand.u32 %s41, 1
        %s200 = scalar_lea.sflag [#allocation3], %s199
        %s201 = sand.u32 %s41, 1
        %s202 = smul.addr %s201, 8
        %s203 = scalar_lea.vmem [#allocation2], %s202
        // Predicated region
        $region33: #{tpu_custom_call.1} parent=31 // pred_check
          %p204 = pneg %p54
        $region34: #{tpu_custom_call.1} parent=31 // pred_check_branch
          %206 = sbr.rel (%p204) target = $region36
        $region35: #{tpu_custom_call.1} parent=31 // pred_region
          %207 = dma.done %s200, 128
        $region36: #{tpu_custom_call.1} parent=31 // pred_fallthru
          _
        // Predicated region
        $region37: #{tpu_custom_call.1} parent=31 // pred_check
          %p208 = pneg %p80
        $region38: #{tpu_custom_call.1} parent=31 // pred_check_branch
          %210 = sbr.rel (%p208) target = $region40
        $region39: #{tpu_custom_call.1} parent=31 // pred_region
          %211 = dma.done [#allocation6], 512
        $region40: #{tpu_custom_call.1} parent=31 // pred_fallthru
          _
        %s212 = sand.u32 %s41, 1
        %s213 = scalar_lea.sflag [#allocation3], %s212
        %s214 = sand.u32 %s41, 1
        %s215 = smul.addr %s214, 8
        %s216 = scalar_lea.vmem [#allocation2], %s215
        %p217 = pneg %p54
        %p218 = pneg %p51
        %p219 = pneg %p80
        %p220 = pneg %p77
        %p221 = scmp.lt.s32.totalorder %s25, 0
        %s222 = scalar_select %p221, %s25, 0
        %s223 = scalar_lea.vmem %s2, %s222
        %p224 = pneg %p106
        %p225 = pneg %p103
        %p226 = pneg %p134
        %p227 = pneg %p131
        %s228 = sand.u32 %s121, 1
        %s229 = scalar_lea.sflag [#allocation4], %s228
        %s230 = sand.u32 %s121, 1
        %s231 = smul.addr %s230, 8
        %s232 = scalar_lea.vmem [#allocation7], %s231
        %p233 = scmp.lt.s32.totalorder %s25, 0
        %s234 = scalar_select %p233, %s25, 0
        %s235 = scalar_lea.vmem %s2, %s234
        %v236 = vld [vmem:[#allocation5] sm:$0xff]
        %v237 = vld [vmem:[#allocation5 + $0x8] sm:$0xff]
        %v238 = vld [vmem:[#allocation5 + $0x10] sm:$0xff]
        %v239 = vld [vmem:[#allocation5 + $0x18] sm:$0xff]
        %v240 = vld [vmem:[%s203] sm:$0xff]
        %v241 = vld [vmem:[%s235] sm:$0x1]
        %v243 = vlaneseq
        %v244 = vshrl.u32 %v243, 7
        %v245 = vsub.s32 0, %v244
        %v246 = vrot.slane %v241, %v245
        %vm248 = vcmask 261120
        %v250 = vsel %vm248, %v240, 0
        %252 = vmatprep.subr.mxu0 0.0
        %253 = vmatpush1.msra.mxu0 %v236
        %254 = vmatprep.subr.mxu0 0.0
        %255 = vmatpush1.msra.mxu0 %v237
        %256 = vmatprep.subr.mxu0 0.0
        %257 = vmatpush1.msra.mxu0 %v238
        %258 = vmatprep.subr.mxu0 0.0
        %259 = vmatpush1.msra.mxu0 %v239
        %260 = vmatprep.subr.mxu0 0.0
        %261 = vmatpush1.msra.mxu0 0.0
        %262 = vmatprep.subr.mxu0 0.0
        %263 = vmatpush1.msra.mxu0 0.0
        %264 = vmatprep.subr.mxu0 0.0
        %265 = vmatpush1.msra.mxu0 0.0
        %266 = vmatprep.subr.mxu0 0.0
        %267 = vmatpush1.msra.mxu0 0.0
        %268 = vmatprep.subr.mxu0 0.0
        %269 = vmatpush1.msra.mxu0 0.0
        %270 = vmatprep.subr.mxu0 0.0
        %271 = vmatpush1.msra.mxu0 0.0
        %272 = vmatprep.subr.mxu0 0.0
        %273 = vmatpush1.msra.mxu0 0.0
        %274 = vmatprep.subr.mxu0 0.0
        %275 = vmatpush1.msra.mxu0 0.0
        %276 = vmatprep.subr.mxu0 0.0
        %277 = vmatpush1.msra.mxu0 0.0
        %278 = vmatprep.subr.mxu0 0.0
        %279 = vmatpush1.msra.mxu0 0.0
        %280 = vmatprep.subr.mxu0 0.0
        %281 = vmatpush1.msra.mxu0 0.0
        %282 = vmatprep.subr.mxu0 0.0
        %283 = vmatpush1.msra.mxu0 0.0
        %284 = vmatprep.subr.mxu0 0.0
        %285 = vmatpush1.msra.mxu0 0.0
        %286 = vmatprep.subr.mxu0 0.0
        %287 = vmatpush1.msra.mxu0 0.0
        %288 = vmatprep.subr.mxu0 0.0
        %289 = vmatpush1.msra.mxu0 0.0
        %290 = vmatprep.subr.mxu0 0.0
        %291 = vmatpush1.msra.mxu0 0.0
        %292 = vmatprep.subr.mxu0 0.0
        %293 = vmatpush1.msra.mxu0 0.0
        %294 = vmatprep.subr.mxu0 0.0
        %295 = vmatpush1.msra.mxu0 0.0
        %296 = vmatprep.subr.mxu0 0.0
        %297 = vmatpush1.msra.mxu0 0.0
        %298 = vmatprep.subr.mxu0 0.0
        %299 = vmatpush1.msra.mxu0 0.0
        %300 = vmatprep.subr.mxu0 0.0
        %301 = vmatpush1.msra.mxu0 0.0
        %302 = vmatprep.subr.mxu0 0.0
        %303 = vmatpush1.msra.mxu0 0.0
        %304 = vmatprep.subr.mxu0 0.0
        %305 = vmatpush1.msra.mxu0 0.0
        %306 = vmatprep.subr.mxu0 0.0
        %307 = vmatpush1.msra.mxu0 0.0
        %308 = vmatprep.subr.mxu0 0.0
        %309 = vmatpush1.msra.mxu0 0.0
        %310 = vmatprep.subr.mxu0 0.0
        %311 = vmatpush1.msra.mxu0 0.0
        %312 = vmatprep.subr.mxu0 0.0
        %313 = vmatpush1.msra.mxu0 0.0
        %314 = vmatprep.subr.mxu0 0.0
        %315 = vmatpush1.msra.mxu0 0.0
        %316 = vmatprep.mubr.f32.mxu0 0.0
        %317 = vmatmul.mubr.f32.gmra.mrb[0].mxu0 %v250
        %v318 = vpop.f32.mrb[0].mxu0
        %v319 = vadd.f32 %v246, %v318
        %v320 = vpop.f32.mrb[0].mxu0
        %321 = vdwg.mxu0
        %323 = vrot.lane.b32.xlu0 %v319, 112
        %v324 = vpop.permute.xlu0 %323
        %v326 = vmax.f32 %v319, %v324
        %327 = vrot.lane.b32.xlu0 %v319, 96
        %v328 = vpop.permute.xlu0 %327
        %v330 = vmax.f32 %v326, %v328
        %331 = vrot.lane.b32.xlu0 %v319, 80
        %v332 = vpop.permute.xlu0 %331
        %v334 = vmax.f32 %v330, %v332
        %vm335 = vcmask 130048
        %336 = vst.msk [vmem:[%s232] sm:$0xff] %vm335, %v334
        %s337 = sand.u32 %s121, 1
        %s338 = scalar_lea.sflag [#allocation4], %s337
        %s339 = sand.u32 %s121, 1
        %s340 = smul.addr %s339, 8
        %s341 = scalar_lea.vmem [#allocation7], %s340
        // Predicated region
        $region41: #{tpu_custom_call.1} parent=31 // pred_check
          %p342 = pneg %p131
        $region42: #{tpu_custom_call.1} parent=31 // pred_check_branch
          %344 = sbr.rel (%p342) target = $region44
        $region43: #{tpu_custom_call.1} parent=31 // pred_region
          %s346 = ssub.s32 128, 128
          %347 = vsyncadd %s338, %s346
          %s348 = sadd.s32 %s25, %s26
          %s349 = smul.addr %s348, 128
          %s350 = scalar_lea.hbm %s3, %s349
          %s352 = sshll.u32 %s341, 4
          %s353 = int_to_ptr.vmem [resolvable:$true] %s352
          %355 = dma.vmem_to_hbm [thread:$0]  %s353, 128, %s350, %s338
        $region44: #{tpu_custom_call.1} parent=31 // pred_fallthru
          _
      $region32: #{tpu_custom_call.1} parent=5 // pred_fallthru
        _
      %p356 = scmp.le.s32.totalorder 2, %s16
      // Predicated region
      $region45: #{tpu_custom_call.1} parent=5 // pred_check
        %p357 = pneg %p356
      $region46: #{tpu_custom_call.1} parent=5 // pred_check_branch
        %359 = sbr.rel (%p357) target = $region48
      $region47: #{tpu_custom_call.1} parent=5 // pred_region
        %s360 = ssub.s32 %s16, 2
        // Predicated region
        $region49: #{tpu_custom_call.1} parent=47 // pred_check
          %p361 = pneg %p137
        $region50: #{tpu_custom_call.1} parent=47 // pred_check_branch
          %363 = sbr.rel (%p361) target = $region52
        $region51: #{tpu_custom_call.1} parent=47 // pred_region
          %s364 = sand.u32 %s122, 1
          %s365 = scalar_lea.sflag [#allocation4], %s364
          %s366 = sand.u32 %s122, 1
          %s367 = smul.addr %s366, 8
          %s368 = scalar_lea.vmem [#allocation7], %s367
          %369 = dma.done %s365, 128
        $region52: #{tpu_custom_call.1} parent=47 // pred_fallthru
          _
      $region48: #{tpu_custom_call.1} parent=5 // pred_fallthru
        _
    $region6: #{tpu_custom_call.1} parent=1 // loop_footer
      %s20 = sadd.s32 1, %s16
    $region7: #{tpu_custom_call.1} parent=1 // loop_footer_branch
      %15 = sbr.rel target = $region3
    $region8: #{tpu_custom_call.1} parent=1 // loop_exit
      _
    %370 = vsyncpa [#allocation3], 1
    %s371 = scalar_lea.sflag [#allocation3], 1
    %372 = vsyncpa %s371, 1
    %373 = vsyncpa [#allocation6], 1
    %374 = vsyncpa [#allocation4], 1
    %s375 = scalar_lea.sflag [#allocation4], 1
    %376 = vsyncpa %s375, 1

</llo_original>
